<compile_context>
chip_gen: v6e
topology: v6e:2x2x1
jax: 0.10.0
libtpu: 0.0.40
codegen_flags: <defaults>
</compile_context>

<pallas_src>
import functools

import jax
import jax.numpy as jnp
from jax.experimental import pallas as pl
from jax.experimental.pallas import tpu as pltpu

HIDDEN_SIZE = [32, 64]
LANE = 128        # pad all feature dims to the 128-lane vreg width
_BIAS_ROWS = 8    # each (1, LANE) bias gets an 8-row (sublane-aligned) block
_MAX_BATCH_TILE = 512


def _round_up(x, m):
    return (x + m - 1) // m * m


def _param_offsets(input_size):
    """Row offsets of each section inside the packed [rows, 128] param slab."""
    o_w1 = 0
    o_b1 = _round_up(input_size, 8)
    o_w2 = o_b1 + _BIAS_ROWS
    o_b2 = o_w2 + LANE
    o_w3 = o_b2 + _BIAS_ROWS
    o_b3 = o_w3 + LANE
    rows = o_b3 + _BIAS_ROWS
    return dict(w1=o_w1, b1=o_b1, w2=o_w2, b2=o_b2, w3=o_w3, b3=o_b3, rows=rows)


def pack_actor_params(w1, b1, w2, b2, w3, b3):
    """Pack weights ([in, out]) and biases ([1, out]) into one zero-padded,
    sublane/lane aligned f32 slab of shape [rows, 128].

    Zero padding keeps the math exact: padded hidden columns stay 0 through
    relu, and padded weight rows contribute 0 to the next matmul."""
    input_size = w1.shape[0]
    offs = _param_offsets(input_size)
    slab = jnp.zeros((offs["rows"], LANE), jnp.float32)
    for name, arr in (("w1", w1), ("b1", b1), ("w2", w2),
                      ("b2", b2), ("w3", w3), ("b3", b3)):
        r, c = arr.shape
        o = offs[name]
        slab = slab.at[o:o + r, :c].set(arr.astype(jnp.float32))
    return slab


def actor_kernel(x_ref, p_ref, o_ref, *, input_size, offs):
    """Fused 3-layer MLP on one batch tile; params are a single resident slab."""
    x = x_ref[...]                                            # [TB, input_size]

    w1 = p_ref[offs["w1"]:offs["w1"] + input_size, :]          # [in, 128]
    b1 = p_ref[offs["b1"]:offs["b1"] + 1, :]                   # [1, 128]
    h = jnp.dot(x, w1, preferred_element_type=jnp.float32) + b1
    h = jnp.maximum(h, 0.0)                                    # [TB, 128]

    w2 = p_ref[offs["w2"]:offs["w2"] + LANE, :]                # [128, 128]
    b2 = p_ref[offs["b2"]:offs["b2"] + 1, :]
    h = jnp.dot(h, w2, preferred_element_type=jnp.float32) + b2
    h = jnp.maximum(h, 0.0)                                    # [TB, 128]

    w3 = p_ref[offs["w3"]:offs["w3"] + LANE, :]                # [128, 128]
    b3 = p_ref[offs["b3"]:offs["b3"] + 1, :]
    out = jnp.tanh(jnp.dot(h, w3, preferred_element_type=jnp.float32) + b3)

    o_ref[...] = out.astype(o_ref.dtype)                       # lane-dense [TB, 128]


@functools.partial(jax.jit, static_argnames=("output_size", "block_batch"))
def actor_forward(state, param_slab, output_size, block_batch=_MAX_BATCH_TILE):
    """state: [B, input_size] f32, param_slab from pack_actor_params.
    Returns [B, output_size] f32 (tanh actions)."""
    B, input_size = state.shape
    offs = _param_offsets(input_size)
    assert param_slab.shape == (offs["rows"], LANE)

    # Batch tile: whole batch if small, else 512-row tiles (pipelined).
    tb = B if B <= block_batch else block_batch
    grid = (pl.cdiv(B, tb),)

    kernel = functools.partial(actor_kernel, input_size=input_size, offs=offs)

    out_padded = pl.pallas_call(
        kernel,
        out_shape=jax.ShapeDtypeStruct((B, LANE), jnp.float32),
        grid=grid,
        in_specs=[
            # state streamed per batch tile
            pl.BlockSpec((tb, input_size), lambda i: (i, 0)),
            # packed params: constant index_map -> single DMA, VMEM-resident
            pl.BlockSpec((offs["rows"], LANE), lambda i: (0, 0)),
        ],
        out_specs=pl.BlockSpec((tb, LANE), lambda i: (i, 0)),
        compiler_params=pltpu.CompilerParams(
            dimension_semantics=("parallel",)),
    )(state, param_slab)

    return out_padded[:, :output_size]


def init_actor_params(key, input_size, hidden_size, output_size):
    """Deterministic init matching nn.Linear default: U(-1/sqrt(fan_in), +).
    Weights stored as [in, out] (PyTorch weight transposed), biases [1, out]."""
    sizes = [(input_size, hidden_size[0]),
             (hidden_size[0], hidden_size[1]),
             (hidden_size[1], output_size)]
    params = []
    for (fan_in, fan_out) in sizes:
        key, kw, kb = jax.random.split(key, 3)
        bound = 1.0 / jnp.sqrt(jnp.float32(fan_in))
        w = jax.random.uniform(kw, (fan_in, fan_out), jnp.float32, -bound, bound)
        b = jax.random.uniform(kb, (1, fan_out), jnp.float32, -bound, bound)
        params.extend([w, b])
    return params


if __name__ == "__main__":
    key = jax.random.PRNGKey(0)
    batch = 8
    input_size = 16   # state dim
    output_size = 4   # action dim

    key, k_state = jax.random.split(key)
    state = jax.random.normal(k_state, (batch, input_size), jnp.float32)

    w1, b1, w2, b2, w3, b3 = init_actor_params(
        key, input_size, HIDDEN_SIZE, output_size)

    # Pack once per weight update in a real training loop.
    slab = pack_actor_params(w1, b1, w2, b2, w3, b3)

    out = actor_forward(state, slab, output_size=output_size)
    out = jax.block_until_ready(out)

    # reference check in plain JAX
    ref = jnp.maximum(state @ w1 + b1, 0.0)
    ref = jnp.maximum(ref @ w2 + b2, 0.0)
    ref = jnp.tanh(ref @ w3 + b3)
    assert out.shape == (batch, output_size)
    assert jnp.allclose(out, ref, atol=1e-5, rtol=1e-5)

    print("KERNEL_OK")
</pallas_src>

<mosaic_0001>
module attributes {stable_mosaic.version = 11 : i64} {
  func.func @actor_kernel(%arg0: i32, %arg1: memref<8x16xf32, #tpu.memory_space<vmem>>, %arg2: memref<296x128xf32, #tpu.memory_space<vmem>>, %arg3: memref<8x128xf32, #tpu.memory_space<vmem>>) attributes {dimension_semantics = [#tpu.dimension_semantics<parallel>], iteration_bounds = array<i64: 1>, scalar_prefetch = 0 : i64, scratch_operands = 0 : i64, tpu.core_type = #tpu.core_type<tc>, window_params = [{transform_indices = @transform_0, window_bounds = array<i64: 8, 16>}, {pipeline_mode = #tpu.pipeline_mode<synchronous>, transform_indices = @transform_1, window_bounds = array<i64: 296, 128>}, {transform_indices = @transform_2, window_bounds = array<i64: 8, 128>}]} {
    %c0 = arith.constant 0 : index
    %c0_0 = arith.constant 0 : index
    %0 = vector.load %arg1[%c0, %c0_0] : memref<8x16xf32, #tpu.memory_space<vmem>>, vector<8x16xf32>
    %c0_1 = arith.constant 0 : index
    %c0_2 = arith.constant 0 : index
    %1 = vector.load %arg2[%c0_1, %c0_2] : memref<296x128xf32, #tpu.memory_space<vmem>>, vector<16x128xf32>
    %c16 = arith.constant 16 : index
    %c0_3 = arith.constant 0 : index
    %2 = vector.load %arg2[%c16, %c0_3] : memref<296x128xf32, #tpu.memory_space<vmem>>, vector<1x128xf32>
    %cst = arith.constant dense<0.000000e+00> : vector<8x128xf32>
    %3 = tpu.matmul %0, %1, %cst {dimension_numbers = #tpu.dot_dimension_numbers<[1], [0], [0], [1], [0, 0, 1, 1], [], []>} : vector<8x16xf32>, vector<16x128xf32>, vector<8x128xf32> -> vector<8x128xf32>
    %4 = vector.broadcast %2 : vector<1x128xf32> to vector<8x128xf32>
    %5 = arith.addf %3, %4 : vector<8x128xf32>
    %cst_4 = arith.constant 0.000000e+00 : f32
    %6 = vector.broadcast %cst_4 : f32 to vector<8x128xf32>
    %7 = arith.maximumf %5, %6 : vector<8x128xf32>
    %c24 = arith.constant 24 : index
    %c0_5 = arith.constant 0 : index
    %8 = vector.load %arg2[%c24, %c0_5] : memref<296x128xf32, #tpu.memory_space<vmem>>, vector<128x128xf32>
    %c152 = arith.constant 152 : index
    %c0_6 = arith.constant 0 : index
    %9 = vector.load %arg2[%c152, %c0_6] : memref<296x128xf32, #tpu.memory_space<vmem>>, vector<1x128xf32>
    %cst_7 = arith.constant dense<0.000000e+00> : vector<8x128xf32>
    %10 = tpu.matmul %7, %8, %cst_7 {dimension_numbers = #tpu.dot_dimension_numbers<[1], [0], [0], [1], [0, 0, 1, 1], [], []>} : vector<8x128xf32>, vector<128x128xf32>, vector<8x128xf32> -> vector<8x128xf32>
    %11 = vector.broadcast %9 : vector<1x128xf32> to vector<8x128xf32>
    %12 = arith.addf %10, %11 : vector<8x128xf32>
    %cst_8 = arith.constant 0.000000e+00 : f32
    %13 = vector.broadcast %cst_8 : f32 to vector<8x128xf32>
    %14 = arith.maximumf %12, %13 : vector<8x128xf32>
    %c160 = arith.constant 160 : index
    %c0_9 = arith.constant 0 : index
    %15 = vector.load %arg2[%c160, %c0_9] : memref<296x128xf32, #tpu.memory_space<vmem>>, vector<128x128xf32>
    %c288 = arith.constant 288 : index
    %c0_10 = arith.constant 0 : index
    %16 = vector.load %arg2[%c288, %c0_10] : memref<296x128xf32, #tpu.memory_space<vmem>>, vector<1x128xf32>
    %cst_11 = arith.constant dense<0.000000e+00> : vector<8x128xf32>
    %17 = tpu.matmul %14, %15, %cst_11 {dimension_numbers = #tpu.dot_dimension_numbers<[1], [0], [0], [1], [0, 0, 1, 1], [], []>} : vector<8x128xf32>, vector<128x128xf32>, vector<8x128xf32> -> vector<8x128xf32>
    %18 = vector.broadcast %16 : vector<1x128xf32> to vector<8x128xf32>
    %19 = arith.addf %17, %18 : vector<8x128xf32>
    %20 = math.tanh %19 : vector<8x128xf32>
    %c0_12 = arith.constant 0 : index
    %c0_13 = arith.constant 0 : index
    %21 = vector.load %arg3[%c0_12, %c0_13] : memref<8x128xf32, #tpu.memory_space<vmem>>, vector<8x128xf32>
    tpu.vector_store %arg3[%c0_12, %c0_13], %20 {strides = array<i32>} : memref<8x128xf32, #tpu.memory_space<vmem>>, vector<8x128xf32>,
    return
  }
  func.func @transform_0(%arg0: i32) -> (i32, i32) {
    %c0_i32 = arith.constant 0 : i32
    %c0_i32_0 = arith.constant 0 : i32
    return %arg0, %c0_i32 : i32, i32
  }
  func.func @transform_1(%arg0: i32) -> (i32, i32) {
    %c0_i32 = arith.constant 0 : i32
    %c0_i32_0 = arith.constant 0 : i32
    %c0_i32_1 = arith.constant 0 : i32
    return %c0_i32, %c0_i32_0 : i32, i32
  }
  func.func @transform_2(%arg0: i32) -> (i32, i32) {
    %c0_i32 = arith.constant 0 : i32
    %c0_i32_0 = arith.constant 0 : i32
    return %arg0, %c0_i32 : i32, i32
  }
}

</mosaic_0001>

<llo_original>
// kernel: actor_forward.1
$region0: #{actor_forward.1}
  #allocation0 [shape = 'u32[]', space=smem, size = 0x4, offset = 0x4, fixed_abs, tag = 'smem constant byte address 0x4 - core index']
  #allocation1 [shape = 'u32[144,128]{1,0:T(1,128)}', space=vmem, size = 0x12000, scoped, tag = 'internal scratch']
  %s0 = inlined_call_operand.hbm [shape: f32[8,16], index: 0, kind: input, shape index: {}]
  %s1 = inlined_call_operand.hbm [shape: f32[296,128], index: 1, kind: input, shape index: {}]
  %s2 = inlined_call_operand.vmem [shape: f32[8,128], index: 2, kind: output, shape index: {}]
  %s3 = sld [smem:[#allocation0]]
  $region26: #{actor_forward.1} parent=0
    _
  %s5 = ssub.s32 1, %s3
  %s6 = scalar_select 0, %s5, %s3
  $region1: #{actor_forward.1} parent=0
    #allocation2 [shape = 'u8[4096]{0}', space=vmem, size = 0x1000, scoped, tag = 'input window, operand 0, single buffered']
    #allocation3 [shape = 's32[1]{0}', space=sflag, size = 0x4, scoped, tag = 'scoped memory for actor_forward.1']
    #allocation4 [shape = 'u8[151552]{0}', space=vmem, size = 0x25000, scoped, tag = 'input window, operand 1, single buffered']
    #allocation5 [shape = 's32[1]{0}', space=sflag, size = 0x4, scoped, tag = 'scoped memory for actor_forward.1']
    %7 = vsyncpa [#allocation3], 0
    %8 = vsyncpa [#allocation5], 0
    // Predicated region
    $region2: #{actor_forward.1} parent=1 // pred_check
      _
    $region3: #{actor_forward.1} parent=1 // pred_check_branch
      %10 = sbr.rel (0) target = $region5
    $region4: #{actor_forward.1} parent=1 // pred_region
      %s12 = ssub.s32 128, 128
      %13 = vsyncadd [#allocation3], %s12
      %s15 = sshll.u32 [#allocation2], 4
      %s16 = int_to_ptr.vmem [resolvable:$true] %s15
      %18 = dma.hbm_to_vmem [thread:$0]  %s0, 128, %s16, [#allocation3]
    $region5: #{actor_forward.1} parent=1 // pred_fallthru
      _
    // Predicated region
    $region6: #{actor_forward.1} parent=1 // pred_check
      _
    $region7: #{actor_forward.1} parent=1 // pred_check_branch
      %20 = sbr.rel (0) target = $region9
    $region8: #{actor_forward.1} parent=1 // pred_region
      %s22 = ssub.s32 4736, 4736
      %23 = vsyncadd [#allocation5], %s22
      %s24 = sshll.u32 [#allocation4], 4
      %s25 = int_to_ptr.vmem [resolvable:$true] %s24
      %30 = dma.hbm_to_vmem [thread:$0]  %s1, 4736, %s25, [#allocation5], 128, 128, 8
    $region9: #{actor_forward.1} parent=1 // pred_fallthru
      _
    // Predicated region
    $region10: #{actor_forward.1} parent=1 // pred_check
      _
    $region11: #{actor_forward.1} parent=1 // pred_check_branch
      %32 = sbr.rel (0) target = $region13
    $region12: #{actor_forward.1} parent=1 // pred_region
      %33 = dma.done [#allocation3], 128
    $region13: #{actor_forward.1} parent=1 // pred_fallthru
      _
    // Predicated region
    $region14: #{actor_forward.1} parent=1 // pred_check
      _
    $region15: #{actor_forward.1} parent=1 // pred_check_branch
      %35 = sbr.rel (0) target = $region17
    $region16: #{actor_forward.1} parent=1 // pred_region
      %36 = dma.done [#allocation5], 4736
    $region17: #{actor_forward.1} parent=1 // pred_fallthru
      _
    %v37 = vld [vmem:[#allocation2] sm:$0xff]
    %v38 = vld [vmem:[#allocation4] sm:$0xff]
    %v39 = vld [vmem:[#allocation4 + $0x8] sm:$0xff]
    %v40 = vld [vmem:[#allocation4 + $0x10] sm:$0x1]
    %v41 = vlaneseq
    %v42 = vshrl.u32 %v41, 7
    %v43 = vsub.s32 0, %v42
    %v44 = vrot.slane %v40, %v43
    %vm45 = vcmask 130048
    %v47 = vsel %vm45, %v37, 0
    %49 = vmatprep.subr.mxu0 0.0
    %50 = vmatpush1.msra.mxu0 0.0
    %51 = vmatprep.subr.mxu0 0.0
    %52 = vmatpush1.msra.mxu0 0.0
    %53 = vmatprep.subr.mxu0 0.0
    %54 = vmatpush1.msra.mxu0 0.0
    %55 = vmatprep.subr.mxu0 0.0
    %56 = vmatpush1.msra.mxu0 0.0
    %57 = vmatprep.subr.mxu0 0.0
    %58 = vmatpush1.msra.mxu0 0.0
    %59 = vmatprep.subr.mxu0 0.0
    %60 = vmatpush1.msra.mxu0 0.0
    %61 = vmatprep.subr.mxu0 0.0
    %62 = vmatpush1.msra.mxu0 0.0
    %63 = vmatprep.subr.mxu0 0.0
    %64 = vmatpush1.msra.mxu0 0.0
    %65 = vmatprep.subr.mxu0 0.0
    %66 = vmatpush1.msra.mxu0 0.0
    %67 = vmatprep.subr.mxu0 0.0
    %68 = vmatpush1.msra.mxu0 0.0
    %69 = vmatprep.subr.mxu0 0.0
    %70 = vmatpush1.msra.mxu0 0.0
    %71 = vmatprep.subr.mxu0 0.0
    %72 = vmatpush1.msra.mxu0 0.0
    %73 = vmatprep.subr.mxu0 0.0
    %74 = vmatpush1.msra.mxu0 0.0
    %75 = vmatprep.subr.mxu0 0.0
    %76 = vmatpush1.msra.mxu0 0.0
    %77 = vmatprep.subr.mxu0 0.0
    %78 = vmatpush1.msra.mxu0 %v39
    %79 = vmatprep.subr.mxu0 0.0
    %80 = vmatpush1.msra.mxu0 %v38
    %81 = vmatprep.subr.mxu0 0.0
    %82 = vmatpush2.msra.mxu0 0.0
    %83 = vmatprep.subr.mxu0 0.0
    %84 = vmatpush2.msra.mxu0 0.0
    %85 = vmatprep.subr.mxu0 0.0
    %86 = vmatpush2.msra.mxu0 0.0
    %87 = vmatprep.subr.mxu0 0.0
    %88 = vmatpush2.msra.mxu0 0.0
    %89 = vmatprep.subr.mxu0 0.0
    %90 = vmatpush2.msra.mxu0 0.0
    %91 = vmatprep.subr.mxu0 0.0
    %92 = vmatpush2.msra.mxu0 0.0
    %93 = vmatprep.subr.mxu0 0.0
    %94 = vmatpush2.msra.mxu0 0.0
    %95 = vmatprep.subr.mxu0 0.0
    %96 = vmatpush2.msra.mxu0 0.0
    %97 = vmatprep.subr.mxu0 0.0
    %98 = vmatpush2.msra.mxu0 0.0
    %99 = vmatprep.subr.mxu0 0.0
    %100 = vmatpush2.msra.mxu0 0.0
    %101 = vmatprep.subr.mxu0 0.0
    %102 = vmatpush2.msra.mxu0 0.0
    %103 = vmatprep.subr.mxu0 0.0
    %104 = vmatpush2.msra.mxu0 0.0
    %105 = vmatprep.subr.mxu0 0.0
    %106 = vmatpush2.msra.mxu0 0.0
    %107 = vmatprep.subr.mxu0 0.0
    %108 = vmatpush2.msra.mxu0 0.0
    %109 = vmatprep.subr.mxu0 0.0
    %110 = vmatpush2.msra.mxu0 0.0
    %111 = vmatprep.subr.mxu0 0.0
    %112 = vmatpush2.msra.mxu0 0.0
    %113 = vmatprep.mubr.f32.mxu0 0.0
    %114 = vmatmul.mubr.f32.gmra.mxu0 %v47
    %v115 = vpop.f32.mrf.mxu0
    %v116 = vadd.f32 %v44, %v115
    %v117 = vpop.f32.mrf.mxu0
    %118 = vdwg.mxu0
    %v119 = vmax.f32 %v116, 0.0
    %v120 = vld [vmem:[#allocation4 + $0x18] sm:$0xff]
    %v121 = vld [vmem:[#allocation4 + $0x20] sm:$0xff]
    %v122 = vld [vmem:[#allocation4 + $0x28] sm:$0xff]
    %v123 = vld [vmem:[#allocation4 + $0x30] sm:$0xff]
    %v124 = vld [vmem:[#allocation4 + $0x38] sm:$0xff]
    %v125 = vld [vmem:[#allocation4 + $0x40] sm:$0xff]
    %v126 = vld [vmem:[#allocation4 + $0x48] sm:$0xff]
    %v127 = vld [vmem:[#allocation4 + $0x50] sm:$0xff]
    %v128 = vld [vmem:[#allocation4 + $0x58] sm:$0xff]
    %v129 = vld [vmem:[#allocation4 + $0x60] sm:$0xff]
    %v130 = vld [vmem:[#allocation4 + $0x68] sm:$0xff]
    %v131 = vld [vmem:[#allocation4 + $0x70] sm:$0xff]
    %v132 = vld [vmem:[#allocation4 + $0x78] sm:$0xff]
    %v133 = vld [vmem:[#allocation4 + $0x80] sm:$0xff]
    %v134 = vld [vmem:[#allocation4 + $0x88] sm:$0xff]
    %v135 = vld [vmem:[#allocation4 + $0x90] sm:$0xff]
    %v136 = vld [vmem:[#allocation4 + $0x98] sm:$0x1]
    %v137 = vlaneseq
    %v138 = vshrl.u32 %v137, 7
    %v139 = vsub.s32 0, %v138
    %v140 = vrot.slane %v136, %v139
    %141 = vmatprep.subr.mxu0 0.0
    %142 = vmatpush1.msra.mxu0 %v135
    %143 = vmatprep.subr.mxu0 0.0
    %144 = vmatpush1.msra.mxu0 %v134
    %145 = vmatprep.subr.mxu0 0.0
    %146 = vmatpush1.msra.mxu0 %v133
    %147 = vmatprep.subr.mxu0 0.0
    %148 = vmatpush1.msra.mxu0 %v132
    %149 = vmatprep.subr.mxu0 0.0
    %150 = vmatpush1.msra.mxu0 %v131
    %151 = vmatprep.subr.mxu0 0.0
    %152 = vmatpush1.msra.mxu0 %v130
    %153 = vmatprep.subr.mxu0 0.0
    %154 = vmatpush1.msra.mxu0 %v129
    %155 = vmatprep.subr.mxu0 0.0
    %156 = vmatpush1.msra.mxu0 %v128
    %157 = vmatprep.subr.mxu0 0.0
    %158 = vmatpush1.msra.mxu0 %v127
    %159 = vmatprep.subr.mxu0 0.0
    %160 = vmatpush1.msra.mxu0 %v126
    %161 = vmatprep.subr.mxu0 0.0
    %162 = vmatpush1.msra.mxu0 %v125
    %163 = vmatprep.subr.mxu0 0.0
    %164 = vmatpush1.msra.mxu0 %v124
    %165 = vmatprep.subr.mxu0 0.0
    %166 = vmatpush1.msra.mxu0 %v123
    %167 = vmatprep.subr.mxu0 0.0
    %168 = vmatpush1.msra.mxu0 %v122
    %169 = vmatprep.subr.mxu0 0.0
    %170 = vmatpush1.msra.mxu0 %v121
    %171 = vmatprep.subr.mxu0 0.0
    %172 = vmatpush1.msra.mxu0 %v120
    %173 = vmatprep.subr.mxu0 0.0
    %174 = vmatpush2.msra.mxu0 0.0
    %175 = vmatprep.subr.mxu0 0.0
    %176 = vmatpush2.msra.mxu0 0.0
    %177 = vmatprep.subr.mxu0 0.0
    %178 = vmatpush2.msra.mxu0 0.0
    %179 = vmatprep.subr.mxu0 0.0
    %180 = vmatpush2.msra.mxu0 0.0
    %181 = vmatprep.subr.mxu0 0.0
    %182 = vmatpush2.msra.mxu0 0.0
    %183 = vmatprep.subr.mxu0 0.0
    %184 = vmatpush2.msra.mxu0 0.0
    %185 = vmatprep.subr.mxu0 0.0
    %186 = vmatpush2.msra.mxu0 0.0
    %187 = vmatprep.subr.mxu0 0.0
    %188 = vmatpush2.msra.mxu0 0.0
    %189 = vmatprep.subr.mxu0 0.0
    %190 = vmatpush2.msra.mxu0 0.0
    %191 = vmatprep.subr.mxu0 0.0
    %192 = vmatpush2.msra.mxu0 0.0
    %193 = vmatprep.subr.mxu0 0.0
    %194 = vmatpush2.msra.mxu0 0.0
    %195 = vmatprep.subr.mxu0 0.0
    %196 = vmatpush2.msra.mxu0 0.0
    %197 = vmatprep.subr.mxu0 0.0
    %198 = vmatpush2.msra.mxu0 0.0
    %199 = vmatprep.subr.mxu0 0.0
    %200 = vmatpush2.msra.mxu0 0.0
    %201 = vmatprep.subr.mxu0 0.0
    %202 = vmatpush2.msra.mxu0 0.0
    %203 = vmatprep.subr.mxu0 0.0
    %204 = vmatpush2.msra.mxu0 0.0
    %205 = vmatprep.mubr.f32.mxu0 0.0
    %206 = vmatmul.mubr.f32.gmra.mxu0 %v119
    %v207 = vpop.f32.mrf.mxu0
    %v208 = vadd.f32 %v140, %v207
    %v209 = vpop.f32.mrf.mxu0
    %210 = vdwg.mxu0
    %v211 = vmax.f32 %v208, 0.0
    %v212 = vld [vmem:[#allocation4 + $0xa0] sm:$0xff]
    %v213 = vld [vmem:[#allocation4 + $0xa8] sm:$0xff]
    %v214 = vld [vmem:[#allocation4 + $0xb0] sm:$0xff]
    %v215 = vld [vmem:[#allocation4 + $0xb8] sm:$0xff]
    %v216 = vld [vmem:[#allocation4 + $0xc0] sm:$0xff]
    %v217 = vld [vmem:[#allocation4 + $0xc8] sm:$0xff]
    %v218 = vld [vmem:[#allocation4 + $0xd0] sm:$0xff]
    %v219 = vld [vmem:[#allocation4 + $0xd8] sm:$0xff]
    %v220 = vld [vmem:[#allocation4 + $0xe0] sm:$0xff]
    %v221 = vld [vmem:[#allocation4 + $0xe8] sm:$0xff]
    %v222 = vld [vmem:[#allocation4 + $0xf0] sm:$0xff]
    %v223 = vld [vmem:[#allocation4 + $0xf8] sm:$0xff]
    %v224 = vld [vmem:[#allocation4 + $0x100] sm:$0xff]
    %v225 = vld [vmem:[#allocation4 + $0x108] sm:$0xff]
    %v226 = vld [vmem:[#allocation4 + $0x110] sm:$0xff]
    %v227 = vld [vmem:[#allocation4 + $0x118] sm:$0xff]
    %v228 = vld [vmem:[#allocation4 + $0x120] sm:$0x1]
    %v229 = vlaneseq
    %v230 = vshrl.u32 %v229, 7
    %v231 = vsub.s32 0, %v230
    %v232 = vrot.slane %v228, %v231
    %233 = vmatprep.subr.mxu0 0.0
    %234 = vmatpush1.msra.mxu0 %v227
    %235 = vmatprep.subr.mxu0 0.0
    %236 = vmatpush1.msra.mxu0 %v226
    %237 = vmatprep.subr.mxu0 0.0
    %238 = vmatpush1.msra.mxu0 %v225
    %239 = vmatprep.subr.mxu0 0.0
    %240 = vmatpush1.msra.mxu0 %v224
    %241 = vmatprep.subr.mxu0 0.0
    %242 = vmatpush1.msra.mxu0 %v223
    %243 = vmatprep.subr.mxu0 0.0
    %244 = vmatpush1.msra.mxu0 %v222
    %245 = vmatprep.subr.mxu0 0.0
    %246 = vmatpush1.msra.mxu0 %v221
    %247 = vmatprep.subr.mxu0 0.0
    %248 = vmatpush1.msra.mxu0 %v220
    %249 = vmatprep.subr.mxu0 0.0
    %250 = vmatpush1.msra.mxu0 %v219
    %251 = vmatprep.subr.mxu0 0.0
    %252 = vmatpush1.msra.mxu0 %v218
    %253 = vmatprep.subr.mxu0 0.0
    %254 = vmatpush1.msra.mxu0 %v217
    %255 = vmatprep.subr.mxu0 0.0
    %256 = vmatpush1.msra.mxu0 %v216
    %257 = vmatprep.subr.mxu0 0.0
    %258 = vmatpush1.msra.mxu0 %v215
    %259 = vmatprep.subr.mxu0 0.0
    %260 = vmatpush1.msra.mxu0 %v214
    %261 = vmatprep.subr.mxu0 0.0
    %262 = vmatpush1.msra.mxu0 %v213
    %263 = vmatprep.subr.mxu0 0.0
    %264 = vmatpush1.msra.mxu0 %v212
    %265 = vmatprep.subr.mxu0 0.0
    %266 = vmatpush2.msra.mxu0 0.0
    %267 = vmatprep.subr.mxu0 0.0
    %268 = vmatpush2.msra.mxu0 0.0
    %269 = vmatprep.subr.mxu0 0.0
    %270 = vmatpush2.msra.mxu0 0.0
    %271 = vmatprep.subr.mxu0 0.0
    %272 = vmatpush2.msra.mxu0 0.0
    %273 = vmatprep.subr.mxu0 0.0
    %274 = vmatpush2.msra.mxu0 0.0
    %275 = vmatprep.subr.mxu0 0.0
    %276 = vmatpush2.msra.mxu0 0.0
    %277 = vmatprep.subr.mxu0 0.0
    %278 = vmatpush2.msra.mxu0 0.0
    %279 = vmatprep.subr.mxu0 0.0
    %280 = vmatpush2.msra.mxu0 0.0
    %281 = vmatprep.subr.mxu0 0.0
    %282 = vmatpush2.msra.mxu0 0.0
    %283 = vmatprep.subr.mxu0 0.0
    %284 = vmatpush2.msra.mxu0 0.0
    %285 = vmatprep.subr.mxu0 0.0
    %286 = vmatpush2.msra.mxu0 0.0
    %287 = vmatprep.subr.mxu0 0.0
    %288 = vmatpush2.msra.mxu0 0.0
    %289 = vmatprep.subr.mxu0 0.0
    %290 = vmatpush2.msra.mxu0 0.0
    %291 = vmatprep.subr.mxu0 0.0
    %292 = vmatpush2.msra.mxu0 0.0
    %293 = vmatprep.subr.mxu0 0.0
    %294 = vmatpush2.msra.mxu0 0.0
    %295 = vmatprep.subr.mxu0 0.0
    %296 = vmatpush2.msra.mxu0 0.0
    %297 = vmatprep.mubr.f32.mxu0 0.0
    %298 = vmatmul.mubr.f32.gmra.mxu0 %v211
    %v299 = vpop.f32.mrf.mxu0
    %v300 = vadd.f32 %v232, %v299
    %v301 = vpop.f32.mrf.mxu0
    %302 = vdwg.mxu0
    %v303 = vtanh.pop %v300
    %304 = vst [vmem:[%s2] sm:$0xff] %v303
    // Predicated region
    $region18: #{actor_forward.1} parent=1 // pred_check
      _
    $region19: #{actor_forward.1} parent=1 // pred_check_branch
      %306 = sbr.rel (0) target = $region21
    $region20: #{actor_forward.1} parent=1 // pred_region
      _
    $region21: #{actor_forward.1} parent=1 // pred_fallthru
      _
    // Predicated region
    $region22: #{actor_forward.1} parent=1 // pred_check
      _
    $region23: #{actor_forward.1} parent=1 // pred_check_branch
      %308 = sbr.rel (0) target = $region25
    $region24: #{actor_forward.1} parent=1 // pred_region
      _
    $region25: #{actor_forward.1} parent=1 // pred_fallthru
      _
    %309 = vsyncpa [#allocation3], 1
    %310 = vsyncpa [#allocation5], 1

</llo_original>
